<compile_context>
chip_gen: v6e
topology: v6e:2x2x1
jax: 0.10.0
libtpu: 0.0.40
codegen_flags: <defaults>
</compile_context>

<pallas_src>
from functools import partial

import jax
import jax.numpy as jnp
from jax.experimental import pallas as pl
from jax.experimental.pallas import tpu as pltpu

LANE = 128


def mlp_kernel(x_ref, w1_ref, w2_ref, w3_ref, b_ref, o_ref, *, window):
    # x_ref : (T, kdim)            one sequence (batch dim squeezed by BlockSpec)
    # w1_ref: (window*kdim, hidden1)
    # w2_ref: (hidden1, hidden2)
    # w3_ref: (hidden2, out_pad)   keep_rate already folded in, zero-padded lanes
    # b_ref : (3, bias_w)          row0=b1, row1=b2, row2=b3 (all zero-padded)
    # o_ref : (1, out_pad)
    t, kdim = x_ref.shape
    hidden1 = w1_ref.shape[1]
    hidden2 = w2_ref.shape[1]
    out_w = o_ref.shape[-1]
    n_win = t - window + 1

    # linear1 on all sliding windows without materializing the window stack:
    # concat(x[i], ..., x[i+window-1]) @ W1t == sum_j x[i+j] @ W1t[j*kdim:(j+1)*kdim]
    acc = jnp.zeros((n_win, hidden1), jnp.float32)
    for j in range(window):  # static unroll
        acc = acc + jnp.dot(
            x_ref[j:j + n_win, :],
            w1_ref[j * kdim:(j + 1) * kdim, :],
            preferred_element_type=jnp.float32,
        )
    h1 = jnp.maximum(acc + b_ref[0:1, :hidden1], 0.0)

    # mean before linear2 (linearity): mean(h1 @ W2 + b2) == mean(h1) @ W2 + b2
    m1 = jnp.mean(h1, axis=0, keepdims=True)                      # (1, hidden1)
    m2 = jnp.dot(m1, w2_ref[...], preferred_element_type=jnp.float32) \
        + b_ref[1:2, :hidden2]
    m2 = jnp.maximum(m2, 0.0)                                     # ReLU after mean

    # eval-time scale (dropoutRate) is folded into w3_ref; b3 lives in bias row 2.
    o_ref[...] = jnp.dot(m2, w3_ref[...], preferred_element_type=jnp.float32) \
        + b_ref[2:3, :out_w]


def prepare_params(params, dropout):
    """One-time (model-load) prep: transpose weights, fold keep_rate into W3,
    zero-pad W3/b3 to 128 lanes, pack all biases into one (3, bias_w) array."""
    w1, b1, w2, b2, w3, b3 = [jnp.asarray(p, jnp.float32) for p in params]
    keep_rate = 1.0 - dropout          # == module's self.dropoutRate (eval scale)
    hidden1, hidden2, n_out = w1.shape[0], w2.shape[0], w3.shape[0]

    out_pad = pl.cdiv(n_out, LANE) * LANE
    bias_w = pl.cdiv(max(hidden1, hidden2, out_pad), LANE) * LANE

    w1t = w1.T                                                    # (window*kdim, h1)
    w2t = w2.T                                                    # (h1, h2)
    w3t = jnp.zeros((hidden2, out_pad), jnp.float32).at[:, :n_out].set(w3.T * keep_rate)

    b_packed = jnp.zeros((3, bias_w), jnp.float32)
    b_packed = b_packed.at[0, :hidden1].set(b1)
    b_packed = b_packed.at[1, :hidden2].set(b2)
    b_packed = b_packed.at[2, :n_out].set(b3)
    return w1t, w2t, w3t, b_packed


@partial(jax.jit, static_argnames=("window", "n_out"))
def mlp_forward_batched(xb, w1t, w2t, w3t, b_packed, *, window, n_out):
    """xb: (B, T, kdim) -> (B, n_out). One pallas_call, grid over the batch."""
    # Replicate the module's padding loop (static shapes -> Python loop is fine).
    while xb.shape[1] < window:
        xb = jnp.concatenate([xb, xb], axis=1)[:, :window]

    B, T, kdim = xb.shape
    out_pad = w3t.shape[1]

    out = pl.pallas_call(
        partial(mlp_kernel, window=window),
        grid=(B,),
        in_specs=[
            pl.BlockSpec((None, T, kdim), lambda b: (b, 0, 0)),      # per-sequence
            pl.BlockSpec(w1t.shape, lambda b: (0, 0)),               # VMEM-resident
            pl.BlockSpec(w2t.shape, lambda b: (0, 0)),
            pl.BlockSpec(w3t.shape, lambda b: (0, 0)),
            pl.BlockSpec(b_packed.shape, lambda b: (0, 0)),
        ],
        out_specs=pl.BlockSpec((None, 1, out_pad), lambda b: (b, 0, 0)),
        out_shape=jax.ShapeDtypeStruct((B, 1, out_pad), jnp.float32),
        compiler_params=pltpu.CompilerParams(
            dimension_semantics=("parallel",)),
    )(xb.astype(jnp.float32), w1t, w2t, w3t, b_packed)
    return out[:, 0, :n_out]


def mlp_forward(x, prepared, *, window, n_out=2):
    """Single sequence (T, kdim) -> (n_out,), matching MLP.forward(x, 'test')."""
    return mlp_forward_batched(x[None], *prepared, window=window, n_out=n_out)[0]


def mlp_reference(x, params, window, dropout):
    """Literal pure-JAX transcription of the PyTorch module (eval stage)."""
    w1, b1, w2, b2, w3, b3 = params
    while x.shape[0] < window:
        x = jnp.concatenate([x, x], axis=0)[:window]
    n = x.shape[0] - window + 1
    xs = jnp.stack([x[i:i + window].reshape(-1) for i in range(n)], axis=0)
    h1 = jnp.maximum(xs @ w1.T + b1, 0.0)
    h2 = h1 @ w2.T + b2
    m = jnp.mean(h2, axis=0, keepdims=True)
    m = jnp.maximum(m, 0.0) * (1.0 - dropout)      # dropoutRate = 1 - dropout
    return (m @ w3.T + b3)[0]


if __name__ == "__main__":
    kdim, window = 8, 4
    hidden1 = hidden2 = 32
    dropout = 0.1
    T, B = 8, 4

    key = jax.random.PRNGKey(0)
    ks = jax.random.split(key, 7)

    xb = jax.random.normal(ks[0], (B, T, kdim), dtype=jnp.float32)
    # PyTorch nn.Linear convention: weight is (out_features, in_features)
    w1 = jax.random.normal(ks[1], (hidden1, kdim * window), jnp.float32) * 0.1
    b1 = jax.random.normal(ks[2], (hidden1,), jnp.float32) * 0.1
    w2 = jax.random.normal(ks[3], (hidden2, hidden1), jnp.float32) * 0.1
    b2 = jax.random.normal(ks[4], (hidden2,), jnp.float32) * 0.1
    w3 = jax.random.normal(ks[5], (2, hidden2), jnp.float32) * 0.1
    b3 = jax.random.normal(ks[6], (2,), jnp.float32) * 0.1
    params = (w1, b1, w2, b2, w3, b3)

    prepared = prepare_params(params, dropout)        # hoisted out of the call path

    # Batched path: B sequences amortized in one pallas_call.
    out_b = mlp_forward_batched(xb, *prepared, window=window, n_out=2)
    jax.block_until_ready(out_b)
    assert out_b.shape == (B, 2)

    # Single-sequence path == MLP.forward(x, stage='test') -> shape (2,)
    out_single = mlp_forward(xb[0], prepared, window=window)
    jax.block_until_ready(out_single)
    assert out_single.shape == (2,)

    # Numerical check against the literal reference implementation.
    ref = jnp.stack([mlp_reference(xb[i], params, window, dropout) for i in range(B)])
    assert jnp.allclose(out_b, ref, atol=1e-4, rtol=1e-4), (out_b, ref)
    assert jnp.allclose(out_single, ref[0], atol=1e-4, rtol=1e-4)

    print("KERNEL_OK")
</pallas_src>

<mosaic_0001>
module attributes {stable_mosaic.version = 11 : i64} {
  func.func @mlp_kernel(%arg0: i32, %arg1: memref<1x8x8xf32, #tpu.memory_space<vmem>>, %arg2: memref<32x32xf32, #tpu.memory_space<vmem>>, %arg3: memref<32x32xf32, #tpu.memory_space<vmem>>, %arg4: memref<32x128xf32, #tpu.memory_space<vmem>>, %arg5: memref<3x128xf32, #tpu.memory_space<vmem>>, %arg6: memref<1x1x128xf32, #tpu.memory_space<vmem>>) attributes {dimension_semantics = [#tpu.dimension_semantics<parallel>], iteration_bounds = array<i64: 4>, scalar_prefetch = 0 : i64, scratch_operands = 0 : i64, tpu.core_type = #tpu.core_type<tc>, window_params = [{transform_indices = @transform_0, window_bounds = array<i64: 1, 8, 8>}, {pipeline_mode = #tpu.pipeline_mode<synchronous>, transform_indices = @transform_1, window_bounds = array<i64: 32, 32>}, {pipeline_mode = #tpu.pipeline_mode<synchronous>, transform_indices = @transform_2, window_bounds = array<i64: 32, 32>}, {pipeline_mode = #tpu.pipeline_mode<synchronous>, transform_indices = @transform_3, window_bounds = array<i64: 32, 128>}, {pipeline_mode = #tpu.pipeline_mode<synchronous>, transform_indices = @transform_4, window_bounds = array<i64: 3, 128>}, {transform_indices = @transform_5, window_bounds = array<i64: 1, 1, 128>}]} {
    %cst = arith.constant 0.000000e+00 : f32
    %0 = vector.broadcast %cst : f32 to vector<5x32xf32>
    %c0 = arith.constant 0 : index
    %c0_0 = arith.constant 0 : index
    %c0_1 = arith.constant 0 : index
    %1 = vector.load %arg1[%c0, %c0_0, %c0_1] : memref<1x8x8xf32, #tpu.memory_space<vmem>>, vector<1x5x8xf32>
    %2 = vector.shape_cast %1 : vector<1x5x8xf32> to vector<5x8xf32>
    %c0_2 = arith.constant 0 : index
    %c0_3 = arith.constant 0 : index
    %3 = vector.load %arg2[%c0_2, %c0_3] : memref<32x32xf32, #tpu.memory_space<vmem>>, vector<8x32xf32>
    %cst_4 = arith.constant dense<0.000000e+00> : vector<5x32xf32>
    %4 = tpu.matmul %2, %3, %cst_4 {dimension_numbers = #tpu.dot_dimension_numbers<[1], [0], [0], [1], [0, 0, 1, 1], [], []>} : vector<5x8xf32>, vector<8x32xf32>, vector<5x32xf32> -> vector<5x32xf32>
    %5 = arith.addf %0, %4 : vector<5x32xf32>
    %c0_5 = arith.constant 0 : index
    %c1 = arith.constant 1 : index
    %c0_6 = arith.constant 0 : index
    %6 = vector.load %arg1[%c0_5, %c1, %c0_6] : memref<1x8x8xf32, #tpu.memory_space<vmem>>, vector<1x5x8xf32>
    %7 = vector.shape_cast %6 : vector<1x5x8xf32> to vector<5x8xf32>
    %c8 = arith.constant 8 : index
    %c0_7 = arith.constant 0 : index
    %8 = vector.load %arg2[%c8, %c0_7] : memref<32x32xf32, #tpu.memory_space<vmem>>, vector<8x32xf32>
    %cst_8 = arith.constant dense<0.000000e+00> : vector<5x32xf32>
    %9 = tpu.matmul %7, %8, %cst_8 {dimension_numbers = #tpu.dot_dimension_numbers<[1], [0], [0], [1], [0, 0, 1, 1], [], []>} : vector<5x8xf32>, vector<8x32xf32>, vector<5x32xf32> -> vector<5x32xf32>
    %10 = arith.addf %5, %9 : vector<5x32xf32>
    %c0_9 = arith.constant 0 : index
    %c2 = arith.constant 2 : index
    %c0_10 = arith.constant 0 : index
    %11 = vector.load %arg1[%c0_9, %c2, %c0_10] : memref<1x8x8xf32, #tpu.memory_space<vmem>>, vector<1x5x8xf32>
    %12 = vector.shape_cast %11 : vector<1x5x8xf32> to vector<5x8xf32>
    %c16 = arith.constant 16 : index
    %c0_11 = arith.constant 0 : index
    %13 = vector.load %arg2[%c16, %c0_11] : memref<32x32xf32, #tpu.memory_space<vmem>>, vector<8x32xf32>
    %cst_12 = arith.constant dense<0.000000e+00> : vector<5x32xf32>
    %14 = tpu.matmul %12, %13, %cst_12 {dimension_numbers = #tpu.dot_dimension_numbers<[1], [0], [0], [1], [0, 0, 1, 1], [], []>} : vector<5x8xf32>, vector<8x32xf32>, vector<5x32xf32> -> vector<5x32xf32>
    %15 = arith.addf %10, %14 : vector<5x32xf32>
    %c0_13 = arith.constant 0 : index
    %c3 = arith.constant 3 : index
    %c0_14 = arith.constant 0 : index
    %16 = vector.load %arg1[%c0_13, %c3, %c0_14] : memref<1x8x8xf32, #tpu.memory_space<vmem>>, vector<1x5x8xf32>
    %17 = vector.shape_cast %16 : vector<1x5x8xf32> to vector<5x8xf32>
    %c24 = arith.constant 24 : index
    %c0_15 = arith.constant 0 : index
    %18 = vector.load %arg2[%c24, %c0_15] : memref<32x32xf32, #tpu.memory_space<vmem>>, vector<8x32xf32>
    %cst_16 = arith.constant dense<0.000000e+00> : vector<5x32xf32>
    %19 = tpu.matmul %17, %18, %cst_16 {dimension_numbers = #tpu.dot_dimension_numbers<[1], [0], [0], [1], [0, 0, 1, 1], [], []>} : vector<5x8xf32>, vector<8x32xf32>, vector<5x32xf32> -> vector<5x32xf32>
    %20 = arith.addf %15, %19 : vector<5x32xf32>
    %c0_17 = arith.constant 0 : index
    %c0_18 = arith.constant 0 : index
    %21 = vector.load %arg5[%c0_17, %c0_18] : memref<3x128xf32, #tpu.memory_space<vmem>>, vector<1x32xf32>
    %22 = vector.broadcast %21 : vector<1x32xf32> to vector<5x32xf32>
    %23 = arith.addf %20, %22 : vector<5x32xf32>
    %cst_19 = arith.constant 0.000000e+00 : f32
    %24 = vector.broadcast %cst_19 : f32 to vector<5x32xf32>
    %25 = arith.maximumf %23, %24 : vector<5x32xf32>
    %cst_20 = arith.constant dense<0.000000e+00> : vector<32xf32>
    %26 = vector.multi_reduction <add>, %25, %cst_20 [0] : vector<5x32xf32> to vector<32xf32>
    %27 = vector.shape_cast %26 : vector<32xf32> to vector<1x32xf32>
    %cst_21 = arith.constant 5.000000e+00 : f32
    %28 = vector.broadcast %cst_21 : f32 to vector<1x32xf32>
    %29 = arith.divf %27, %28 : vector<1x32xf32>
    %c0_22 = arith.constant 0 : index
    %c0_23 = arith.constant 0 : index
    %30 = vector.load %arg3[%c0_22, %c0_23] : memref<32x32xf32, #tpu.memory_space<vmem>>, vector<32x32xf32>
    %cst_24 = arith.constant dense<0.000000e+00> : vector<1x32xf32>
    %31 = tpu.matmul %29, %30, %cst_24 {dimension_numbers = #tpu.dot_dimension_numbers<[1], [0], [0], [1], [0, 0, 1, 1], [], []>} : vector<1x32xf32>, vector<32x32xf32>, vector<1x32xf32> -> vector<1x32xf32>
    %c1_25 = arith.constant 1 : index
    %c0_26 = arith.constant 0 : index
    %32 = vector.load %arg5[%c1_25, %c0_26] : memref<3x128xf32, #tpu.memory_space<vmem>>, vector<1x32xf32>
    %33 = arith.addf %31, %32 : vector<1x32xf32>
    %cst_27 = arith.constant 0.000000e+00 : f32
    %34 = vector.broadcast %cst_27 : f32 to vector<1x32xf32>
    %35 = arith.maximumf %33, %34 : vector<1x32xf32>
    %c0_28 = arith.constant 0 : index
    %c0_29 = arith.constant 0 : index
    %36 = vector.load %arg4[%c0_28, %c0_29] : memref<32x128xf32, #tpu.memory_space<vmem>>, vector<32x128xf32>
    %cst_30 = arith.constant dense<0.000000e+00> : vector<1x128xf32>
    %37 = tpu.matmul %35, %36, %cst_30 {dimension_numbers = #tpu.dot_dimension_numbers<[1], [0], [0], [1], [0, 0, 1, 1], [], []>} : vector<1x32xf32>, vector<32x128xf32>, vector<1x128xf32> -> vector<1x128xf32>
    %c2_31 = arith.constant 2 : index
    %c0_32 = arith.constant 0 : index
    %38 = vector.load %arg5[%c2_31, %c0_32] : memref<3x128xf32, #tpu.memory_space<vmem>>, vector<1x128xf32>
    %39 = arith.addf %37, %38 : vector<1x128xf32>
    %c0_33 = arith.constant 0 : index
    %c0_34 = arith.constant 0 : index
    %c0_35 = arith.constant 0 : index
    %40 = vector.load %arg6[%c0_33, %c0_34, %c0_35] : memref<1x1x128xf32, #tpu.memory_space<vmem>>, vector<1x1x128xf32>
    %41 = vector.shape_cast %40 : vector<1x1x128xf32> to vector<1x128xf32>
    %42 = vector.shape_cast %39 : vector<1x128xf32> to vector<1x1x128xf32>
    tpu.vector_store %arg6[%c0_33, %c0_34, %c0_35], %42 {strides = array<i32>} : memref<1x1x128xf32, #tpu.memory_space<vmem>>, vector<1x1x128xf32>,
    return
  }
  func.func @transform_0(%arg0: i32) -> (i32, i32, i32) {
    %c0_i32 = arith.constant 0 : i32
    %c0_i32_0 = arith.constant 0 : i32
    %c0_i32_1 = arith.constant 0 : i32
    return %arg0, %c0_i32, %c0_i32_0 : i32, i32, i32
  }
  func.func @transform_1(%arg0: i32) -> (i32, i32) {
    %c0_i32 = arith.constant 0 : i32
    %c0_i32_0 = arith.constant 0 : i32
    %c0_i32_1 = arith.constant 0 : i32
    return %c0_i32, %c0_i32_0 : i32, i32
  }
  func.func @transform_2(%arg0: i32) -> (i32, i32) {
    %c0_i32 = arith.constant 0 : i32
    %c0_i32_0 = arith.constant 0 : i32
    %c0_i32_1 = arith.constant 0 : i32
    return %c0_i32, %c0_i32_0 : i32, i32
  }
  func.func @transform_3(%arg0: i32) -> (i32, i32) {
    %c0_i32 = arith.constant 0 : i32
    %c0_i32_0 = arith.constant 0 : i32
    %c0_i32_1 = arith.constant 0 : i32
    return %c0_i32, %c0_i32_0 : i32, i32
  }
  func.func @transform_4(%arg0: i32) -> (i32, i32) {
    %c0_i32 = arith.constant 0 : i32
    %c0_i32_0 = arith.constant 0 : i32
    %c0_i32_1 = arith.constant 0 : i32
    return %c0_i32, %c0_i32_0 : i32, i32
  }
  func.func @transform_5(%arg0: i32) -> (i32, i32, i32) {
    %c0_i32 = arith.constant 0 : i32
    %c0_i32_0 = arith.constant 0 : i32
    %c0_i32_1 = arith.constant 0 : i32
    return %arg0, %c0_i32, %c0_i32_0 : i32, i32, i32
  }
}

</mosaic_0001>

<llo_original>
// kernel: mlp_forward_batched.1
$region0: #{mlp_forward_batched.1}
  #allocation0 [shape = 'u32[]', space=smem, size = 0x4, offset = 0x4, fixed_abs, tag = 'smem constant byte address 0x4 - core index']
  #allocation1 [shape = 'u32[144,128]{1,0:T(1,128)}', space=vmem, size = 0x12000, scoped, tag = 'internal scratch']
  %s0 = inlined_call_operand.hbm [shape: f32[4,8,8], index: 0, kind: input, shape index: {}]
  %s1 = inlined_call_operand.hbm [shape: f32[32,32], index: 1, kind: input, shape index: {}]
  %s2 = inlined_call_operand.hbm [shape: f32[32,32], index: 2, kind: input, shape index: {}]
  %s3 = inlined_call_operand.hbm [shape: f32[32,128], index: 3, kind: input, shape index: {}]
  %s4 = inlined_call_operand.vmem [shape: f32[3,128], index: 4, kind: input, shape index: {}]
  %s5 = inlined_call_operand.vmem [shape: f32[4,1,128], index: 5, kind: output, shape index: {}]
  %s6 = sld [smem:[#allocation0]]
  $region69: #{mlp_forward_batched.1} parent=0
    _
  %s8 = ssub.s32 1, %s6
  %s9 = scalar_select 0, %s8, %s6
  $region1: #{mlp_forward_batched.1} parent=0
    #allocation2 [shape = 'u8[8192]{0}', space=vmem, size = 0x2000, scoped, tag = 'input window, operand 0']
    #allocation3 [shape = 's32[2]{0}', space=sflag, size = 0x8, scoped, tag = 'scoped memory for mlp_forward_batched.1']
    #allocation4 [shape = 'u8[16384]{0}', space=vmem, size = 0x4000, scoped, tag = 'input window, operand 1, single buffered']
    #allocation5 [shape = 's32[1]{0}', space=sflag, size = 0x4, scoped, tag = 'scoped memory for mlp_forward_batched.1']
    #allocation6 [shape = 'u8[16384]{0}', space=vmem, size = 0x4000, scoped, tag = 'input window, operand 2, single buffered']
    #allocation7 [shape = 'u8[16384]{0}', space=vmem, size = 0x4000, scoped, tag = 'input window, operand 3, single buffered']
    #allocation8 [shape = 's32[1]{0}', space=sflag, size = 0x4, scoped, tag = 'scoped memory for mlp_forward_batched.1']
    %10 = vsyncpa [#allocation3], 0
    %s11 = scalar_lea.sflag [#allocation3], 1
    %12 = vsyncpa %s11, 0
    %13 = vsyncpa [#allocation5], 0
    %14 = vsyncpa [#allocation8], 0
    loop: start=0, step=1, limit=6
    $region2: #{mlp_forward_batched.1} parent=1 // loop_pre_header
      _
    $region3: #{mlp_forward_batched.1} parent=1 // loop_header
      %s16 = sphi 0, %s20
      %p17 = scmp.ge.s32.totalorder %s16, 6
      %s26 = sphi 0, %s28
      %s29 = sphi 0, %s26
      %s30 = sphi 0, %s29
      %s46 = sphi 0, %s30
      %s50 = sphi 0, %s50
      %s52 = sphi 0, %s50
      %s53 = sphi 0, %s52
      %s67 = sphi 0, %s53
      %s71 = sphi 0, %s71
      %s73 = sphi 0, %s71
      %s74 = sphi 0, %s73
      %s88 = sphi 0, %s74
      %s92 = sphi 0, %s92
      %s94 = sphi 0, %s92
      %s95 = sphi 0, %s94
      %s109 = sphi 0, %s95
      %s113 = sphi 0, %s113
      %s115 = sphi 0, %s113
      %s116 = sphi 0, %s115
      %s130 = sphi 0, %s116
      %s136 = sphi 0, %s138
      %s139 = sphi 0, %s136
      %s140 = sphi 0, %s139
      %s156 = sphi 0, %s140
    $region4: #{mlp_forward_batched.1} parent=1 // loop_header_branch
      %19 = sbr.rel (%p17) target = $region8
    $region5: #{mlp_forward_batched.1} parent=1 // loop_body
      %s21 = ssub.s32 %s16, 1
      %s22 = ssub.s32 %s16, 2
      %s23 = sadd.s32 %s16, 1
      %s24 = ssub.s32 %s16, %s23
      %p25 = scmp.eq.s32.totalorder %s24, 0
      %s27 = sadd.s32 %s26, 1
      %s28 = scalar_select %p25, %s26, %s27
      %p31 = pneg %p25
      %p32 = scmp.eq.s32.totalorder %s16, 3
      %p33 = por %p31, %p32
      %p34 = scmp.ne.s32.totalorder %s26, %s29
      %p35 = scmp.eq.s32.totalorder %s16, 0
      %p36 = por %p34, %p35
      %p37 = scmp.ne.s32.totalorder %s26, %s29
      %p38 = scmp.eq.s32.totalorder %s21, 3
      %p39 = por %p37, %p38
      %p40 = scmp.ne.s32.totalorder %s29, %s30
      %p41 = scmp.eq.s32.totalorder %s21, 0
      %p42 = por %p40, %p41
      %p43 = scmp.ne.s32.totalorder %s29, %s30
      %p44 = scmp.eq.s32.totalorder %s22, 3
      %p45 = por %p43, %p44
      %p47 = scmp.ne.s32.totalorder %s30, %s46
      %p48 = scmp.eq.s32.totalorder %s22, 0
      %p49 = por %p47, %p48
      %s51 = sadd.s32 %s50, 1
      %p54 = scmp.eq.s32.totalorder %s16, 3
      %p55 = scmp.ne.s32.totalorder %s50, %s52
      %p56 = scmp.eq.s32.totalorder %s16, 0
      %p57 = por %p55, %p56
      %p58 = scmp.ne.s32.totalorder %s50, %s52
      %p59 = scmp.eq.s32.totalorder %s21, 3
      %p60 = por %p58, %p59
      %p61 = scmp.ne.s32.totalorder %s52, %s53
      %p62 = scmp.eq.s32.totalorder %s21, 0
      %p63 = por %p61, %p62
      %p64 = scmp.ne.s32.totalorder %s52, %s53
      %p65 = scmp.eq.s32.totalorder %s22, 3
      %p66 = por %p64, %p65
      %p68 = scmp.ne.s32.totalorder %s53, %s67
      %p69 = scmp.eq.s32.totalorder %s22, 0
      %p70 = por %p68, %p69
      %s72 = sadd.s32 %s71, 1
      %p75 = scmp.eq.s32.totalorder %s16, 3
      %p76 = scmp.ne.s32.totalorder %s71, %s73
      %p77 = scmp.eq.s32.totalorder %s16, 0
      %p78 = por %p76, %p77
      %p79 = scmp.ne.s32.totalorder %s71, %s73
      %p80 = scmp.eq.s32.totalorder %s21, 3
      %p81 = por %p79, %p80
      %p82 = scmp.ne.s32.totalorder %s73, %s74
      %p83 = scmp.eq.s32.totalorder %s21, 0
      %p84 = por %p82, %p83
      %p85 = scmp.ne.s32.totalorder %s73, %s74
      %p86 = scmp.eq.s32.totalorder %s22, 3
      %p87 = por %p85, %p86
      %p89 = scmp.ne.s32.totalorder %s74, %s88
      %p90 = scmp.eq.s32.totalorder %s22, 0
      %p91 = por %p89, %p90
      %s93 = sadd.s32 %s92, 1
      %p96 = scmp.eq.s32.totalorder %s16, 3
      %p97 = scmp.ne.s32.totalorder %s92, %s94
      %p98 = scmp.eq.s32.totalorder %s16, 0
      %p99 = por %p97, %p98
      %p100 = scmp.ne.s32.totalorder %s92, %s94
      %p101 = scmp.eq.s32.totalorder %s21, 3
      %p102 = por %p100, %p101
      %p103 = scmp.ne.s32.totalorder %s94, %s95
      %p104 = scmp.eq.s32.totalorder %s21, 0
      %p105 = por %p103, %p104
      %p106 = scmp.ne.s32.totalorder %s94, %s95
      %p107 = scmp.eq.s32.totalorder %s22, 3
      %p108 = por %p106, %p107
      %p110 = scmp.ne.s32.totalorder %s95, %s109
      %p111 = scmp.eq.s32.totalorder %s22, 0
      %p112 = por %p110, %p111
      %s114 = sadd.s32 %s113, 1
      %p117 = scmp.eq.s32.totalorder %s16, 3
      %p118 = scmp.ne.s32.totalorder %s113, %s115
      %p119 = scmp.eq.s32.totalorder %s16, 0
      %p120 = por %p118, %p119
      %p121 = scmp.ne.s32.totalorder %s113, %s115
      %p122 = scmp.eq.s32.totalorder %s21, 3
      %p123 = por %p121, %p122
      %p124 = scmp.ne.s32.totalorder %s115, %s116
      %p125 = scmp.eq.s32.totalorder %s21, 0
      %p126 = por %p124, %p125
      %p127 = scmp.ne.s32.totalorder %s115, %s116
      %p128 = scmp.eq.s32.totalorder %s22, 3
      %p129 = por %p127, %p128
      %p131 = scmp.ne.s32.totalorder %s116, %s130
      %p132 = scmp.eq.s32.totalorder %s22, 0
      %p133 = por %p131, %p132
      %s134 = ssub.s32 %s16, %s23
      %p135 = scmp.eq.s32.totalorder %s134, 0
      %s137 = sadd.s32 %s136, 1
      %s138 = scalar_select %p135, %s136, %s137
      %p141 = pneg %p135
      %p142 = scmp.eq.s32.totalorder %s16, 3
      %p143 = por %p141, %p142
      %p144 = scmp.ne.s32.totalorder %s136, %s139
      %p145 = scmp.eq.s32.totalorder %s16, 0
      %p146 = por %p144, %p145
      %p147 = scmp.ne.s32.totalorder %s136, %s139
      %p148 = scmp.eq.s32.totalorder %s21, 3
      %p149 = por %p147, %p148
      %p150 = scmp.ne.s32.totalorder %s139, %s140
      %p151 = scmp.eq.s32.totalorder %s21, 0
      %p152 = por %p150, %p151
      %p153 = scmp.ne.s32.totalorder %s139, %s140
      %p154 = scmp.eq.s32.totalorder %s22, 3
      %p155 = por %p153, %p154
      %p157 = scmp.ne.s32.totalorder %s140, %s156
      %p158 = scmp.eq.s32.totalorder %s22, 0
      %p159 = por %p157, %p158
      %p160 = scmp.le.s32.totalorder 1, %s16
      %p161 = scmp.lt.s32.totalorder %s16, 5
      %p162 = pnand %p160, %p161
      %p163 = pneg %p162
      // Predicated region
      $region9: #{mlp_forward_batched.1} parent=5 // pred_check
        _
      $region10: #{mlp_forward_batched.1} parent=5 // pred_check_branch
        %165 = sbr.rel (%p162) target = $region12
      $region11: #{mlp_forward_batched.1} parent=5 // pred_region
        %s166 = ssub.s32 %s16, 1
        // Predicated region
        $region13: #{mlp_forward_batched.1} parent=11 // pred_check
          %p167 = pneg %p63
        $region14: #{mlp_forward_batched.1} parent=11 // pred_check_branch
          %169 = sbr.rel (%p167) target = $region16
        $region15: #{mlp_forward_batched.1} parent=11 // pred_region
          %s171 = ssub.s32 512, 512
          %172 = vsyncadd [#allocation5], %s171
          %s173 = sshll.u32 [#allocation4], 4
          %s174 = int_to_ptr.vmem [resolvable:$true] %s173
          %179 = dma.hbm_to_vmem [thread:$0]  %s1, 512, %s174, [#allocation5], 128, 128, 8
        $region16: #{mlp_forward_batched.1} parent=11 // pred_fallthru
          _
        // Predicated region
        $region17: #{mlp_forward_batched.1} parent=11 // pred_check
          %p180 = pneg %p84
        $region18: #{mlp_forward_batched.1} parent=11 // pred_check_branch
          %182 = sbr.rel (%p180) target = $region20
        $region19: #{mlp_forward_batched.1} parent=11 // pred_region
          %s184 = ssub.s32 512, 512
          %185 = vsyncadd [#allocation5], %s184
          %s186 = sshll.u32 [#allocation6], 4
          %s187 = int_to_ptr.vmem [resolvable:$true] %s186
          %192 = dma.hbm_to_vmem [thread:$0]  %s2, 512, %s187, [#allocation5], 128, 128, 8
        $region20: #{mlp_forward_batched.1} parent=11 // pred_fallthru
          _
        // Predicated region
        $region21: #{mlp_forward_batched.1} parent=11 // pred_check
          %p193 = pneg %p105
        $region22: #{mlp_forward_batched.1} parent=11 // pred_check_branch
          %195 = sbr.rel (%p193) target = $region24
        $region23: #{mlp_forward_batched.1} parent=11 // pred_region
          %s197 = ssub.s32 512, 512
          %198 = vsyncadd [#allocation8], %s197
          %s199 = sshll.u32 [#allocation7], 4
          %s200 = int_to_ptr.vmem [resolvable:$true] %s199
          %205 = dma.hbm_to_vmem [thread:$0]  %s3, 512, %s200, [#allocation8], 128, 128, 8
        $region24: #{mlp_forward_batched.1} parent=11 // pred_fallthru
          _
        // Predicated region
        $region25: #{mlp_forward_batched.1} parent=11 // pred_check
          %p206 = pneg %p126
        $region26: #{mlp_forward_batched.1} parent=11 // pred_check_branch
          %208 = sbr.rel (%p206) target = $region28
        $region27: #{mlp_forward_batched.1} parent=11 // pred_region
          _
        $region28: #{mlp_forward_batched.1} parent=11 // pred_fallthru
          _
      $region12: #{mlp_forward_batched.1} parent=5 // pred_fallthru
        _
      %p209 = scmp.lt.s32.totalorder %s16, 4
      // Predicated region
      $region29: #{mlp_forward_batched.1} parent=5 // pred_check
        %p210 = pneg %p209
      $region30: #{mlp_forward_batched.1} parent=5 // pred_check_branch
        %212 = sbr.rel (%p210) target = $region32
      $region31: #{mlp_forward_batched.1} parent=5 // pred_region
        // Predicated region
        $region33: #{mlp_forward_batched.1} parent=31 // pred_check
          %p213 = pneg %p36
        $region34: #{mlp_forward_batched.1} parent=31 // pred_check_branch
          %215 = sbr.rel (%p213) target = $region36
        $region35: #{mlp_forward_batched.1} parent=31 // pred_region
          %s216 = sand.u32 %s26, 1
          %s217 = scalar_lea.sflag [#allocation3], %s216
          %s218 = sand.u32 %s26, 1
          %s219 = smul.addr %s218, 8
          %s220 = scalar_lea.vmem [#allocation2], %s219
          %s222 = ssub.s32 128, 128
          %223 = vsyncadd %s217, %s222
          %s224 = smul.addr %s16, 128
          %s225 = scalar_lea.hbm %s0, %s224
          %s227 = sshll.u32 %s220, 4
          %s228 = int_to_ptr.vmem [resolvable:$true] %s227
          %230 = dma.hbm_to_vmem [thread:$0]  %s225, 128, %s228, %s217
        $region36: #{mlp_forward_batched.1} parent=31 // pred_fallthru
          _
      $region32: #{mlp_forward_batched.1} parent=5 // pred_fallthru
        _
      %p231 = scmp.le.s32.totalorder 1, %s16
      %p232 = scmp.lt.s32.totalorder %s16, 5
      %p233 = pnand %p231, %p232
      %p234 = pneg %p233
      // Predicated region
      $region37: #{mlp_forward_batched.1} parent=5 // pred_check
        _
      $region38: #{mlp_forward_batched.1} parent=5 // pred_check_branch
        %236 = sbr.rel (%p233) target = $region40
      $region39: #{mlp_forward_batched.1} parent=5 // pred_region
        %s237 = ssub.s32 %s16, 1
        %s238 = sand.u32 %s29, 1
        %s239 = scalar_lea.sflag [#allocation3], %s238
        %s240 = sand.u32 %s29, 1
        %s241 = smul.addr %s240, 8
        %s242 = scalar_lea.vmem [#allocation2], %s241
        // Predicated region
        $region41: #{mlp_forward_batched.1} parent=39 // pred_check
          %p243 = pneg %p42
        $region42: #{mlp_forward_batched.1} parent=39 // pred_check_branch
          %245 = sbr.rel (%p243) target = $region44
        $region43: #{mlp_forward_batched.1} parent=39 // pred_region
          %246 = dma.done %s239, 128
        $region44: #{mlp_forward_batched.1} parent=39 // pred_fallthru
          _
        // Predicated region
        $region45: #{mlp_forward_batched.1} parent=39 // pred_check
          %p247 = pneg %p63
        $region46: #{mlp_forward_batched.1} parent=39 // pred_check_branch
          %249 = sbr.rel (%p247) target = $region48
        $region47: #{mlp_forward_batched.1} parent=39 // pred_region
          %250 = dma.done [#allocation5], 512
        $region48: #{mlp_forward_batched.1} parent=39 // pred_fallthru
          _
        // Predicated region
        $region49: #{mlp_forward_batched.1} parent=39 // pred_check
          %p251 = pneg %p84
        $region50: #{mlp_forward_batched.1} parent=39 // pred_check_branch
          %253 = sbr.rel (%p251) target = $region52
        $region51: #{mlp_forward_batched.1} parent=39 // pred_region
          %254 = dma.done [#allocation5], 512
        $region52: #{mlp_forward_batched.1} parent=39 // pred_fallthru
          _
        // Predicated region
        $region53: #{mlp_forward_batched.1} parent=39 // pred_check
          %p255 = pneg %p105
        $region54: #{mlp_forward_batched.1} parent=39 // pred_check_branch
          %257 = sbr.rel (%p255) target = $region56
        $region55: #{mlp_forward_batched.1} parent=39 // pred_region
          %258 = dma.done [#allocation8], 512
        $region56: #{mlp_forward_batched.1} parent=39 // pred_fallthru
          _
        %s259 = sand.u32 %s29, 1
        %s260 = scalar_lea.sflag [#allocation3], %s259
        %s261 = sand.u32 %s29, 1
        %s262 = smul.addr %s261, 8
        %s263 = scalar_lea.vmem [#allocation2], %s262
        %p264 = pneg %p42
        %p265 = pneg %p39
        %p266 = pneg %p63
        %p267 = pneg %p60
        %p268 = pneg %p84
        %p269 = pneg %p81
        %p270 = pneg %p105
        %p271 = pneg %p102
        %p272 = pneg %p126
        %p273 = pneg %p123
        %p274 = pneg %p152
        %p275 = pneg %p149
        %p276 = scmp.lt.s32.totalorder %s21, 3
        %s277 = scalar_select %p276, %s21, 3
        %s278 = scalar_lea.vmem %s5, %s277
        %p279 = scmp.lt.s32.totalorder %s21, 3
        %s280 = scalar_select %p279, %s21, 3
        %s281 = scalar_lea.vmem %s5, %s280
        %v282 = vld [vmem:[%s242] sm:$0x1f]
        %v283 = vld [vmem:[#allocation4] sm:$0xff]
        %v284 = vld [vmem:[%s242 + $0x1] sm:$0x1f]
        %v285 = vld [vmem:[#allocation4 + $0x8] sm:$0xff]
        %vm286 = vcmask 64512
        %v288 = vsel %vm286, %v284, 0
        %290 = vmatprep.subr.mxu0 0.0
        %291 = vmatpush1.msra.mxu0 0.0
        %292 = vmatprep.subr.mxu0 0.0
        %293 = vmatpush1.msra.mxu0 0.0
        %294 = vmatprep.subr.mxu0 0.0
        %295 = vmatpush1.msra.mxu0 0.0
        %296 = vmatprep.subr.mxu0 0.0
        %297 = vmatpush1.msra.mxu0 0.0
        %298 = vmatprep.subr.mxu0 0.0
        %299 = vmatpush1.msra.mxu0 0.0
        %300 = vmatprep.subr.mxu0 0.0
        %301 = vmatpush1.msra.mxu0 0.0
        %302 = vmatprep.subr.mxu0 0.0
        %303 = vmatpush1.msra.mxu0 0.0
        %304 = vmatprep.subr.mxu0 0.0
        %305 = vmatpush1.msra.mxu0 0.0
        %306 = vmatprep.subr.mxu0 0.0
        %307 = vmatpush1.msra.mxu0 0.0
        %308 = vmatprep.subr.mxu0 0.0
        %309 = vmatpush1.msra.mxu0 0.0
        %310 = vmatprep.subr.mxu0 0.0
        %311 = vmatpush1.msra.mxu0 0.0
        %312 = vmatprep.subr.mxu0 0.0
        %313 = vmatpush1.msra.mxu0 0.0
        %314 = vmatprep.subr.mxu0 0.0
        %315 = vmatpush1.msra.mxu0 0.0
        %316 = vmatprep.subr.mxu0 0.0
        %317 = vmatpush1.msra.mxu0 0.0
        %318 = vmatprep.subr.mxu0 0.0
        %319 = vmatpush1.msra.mxu0 0.0
        %320 = vmatprep.subr.mxu0 0.0
        %321 = vmatpush1.msra.mxu0 %v285
        %322 = vmatprep.subr.mxu0 0.0
        %323 = vmatpush2.msra.mxu0 0.0
        %324 = vmatprep.subr.mxu0 0.0
        %325 = vmatpush2.msra.mxu0 0.0
        %326 = vmatprep.subr.mxu0 0.0
        %327 = vmatpush2.msra.mxu0 0.0
        %328 = vmatprep.subr.mxu0 0.0
        %329 = vmatpush2.msra.mxu0 0.0
        %330 = vmatprep.subr.mxu0 0.0
        %331 = vmatpush2.msra.mxu0 0.0
        %332 = vmatprep.subr.mxu0 0.0
        %333 = vmatpush2.msra.mxu0 0.0
        %334 = vmatprep.subr.mxu0 0.0
        %335 = vmatpush2.msra.mxu0 0.0
        %336 = vmatprep.subr.mxu0 0.0
        %337 = vmatpush2.msra.mxu0 0.0
        %338 = vmatprep.subr.mxu0 0.0
        %339 = vmatpush2.msra.mxu0 0.0
        %340 = vmatprep.subr.mxu0 0.0
        %341 = vmatpush2.msra.mxu0 0.0
        %342 = vmatprep.subr.mxu0 0.0
        %343 = vmatpush2.msra.mxu0 0.0
        %344 = vmatprep.subr.mxu0 0.0
        %345 = vmatpush2.msra.mxu0 0.0
        %346 = vmatprep.subr.mxu0 0.0
        %347 = vmatpush2.msra.mxu0 0.0
        %348 = vmatprep.subr.mxu0 0.0
        %349 = vmatpush2.msra.mxu0 0.0
        %350 = vmatprep.subr.mxu0 0.0
        %351 = vmatpush2.msra.mxu0 0.0
        %352 = vmatprep.subr.mxu0 0.0
        %353 = vmatpush2.msra.mxu0 0.0
        %354 = vmatprep.mubr.f32.mxu0 0.0
        %355 = vmatmul.mubr.f32.gmra.mxu0 %v288
        %v356 = vpop.f32.mrf.mxu0
        %v357 = vadd.f32 0.0, %v356
        %v358 = vpop.f32.mrf.mxu0
        %359 = vdwg.mxu0
        %v361 = vsel %vm286, %v282, 0
        %363 = vmatprep.subr.mxu0 0.0
        %364 = vmatpush1.msra.mxu0 0.0
        %365 = vmatprep.subr.mxu0 0.0
        %366 = vmatpush1.msra.mxu0 0.0
        %367 = vmatprep.subr.mxu0 0.0
        %368 = vmatpush1.msra.mxu0 0.0
        %369 = vmatprep.subr.mxu0 0.0
        %370 = vmatpush1.msra.mxu0 0.0
        %371 = vmatprep.subr.mxu0 0.0
        %372 = vmatpush1.msra.mxu0 0.0
        %373 = vmatprep.subr.mxu0 0.0
        %374 = vmatpush1.msra.mxu0 0.0
        %375 = vmatprep.subr.mxu0 0.0
        %376 = vmatpush1.msra.mxu0 0.0
        %377 = vmatprep.subr.mxu0 0.0
        %378 = vmatpush1.msra.mxu0 0.0
        %379 = vmatprep.subr.mxu0 0.0
        %380 = vmatpush1.msra.mxu0 0.0
        %381 = vmatprep.subr.mxu0 0.0
        %382 = vmatpush1.msra.mxu0 0.0
        %383 = vmatprep.subr.mxu0 0.0
        %384 = vmatpush1.msra.mxu0 0.0
        %385 = vmatprep.subr.mxu0 0.0
        %386 = vmatpush1.msra.mxu0 0.0
        %387 = vmatprep.subr.mxu0 0.0
        %388 = vmatpush1.msra.mxu0 0.0
        %389 = vmatprep.subr.mxu0 0.0
        %390 = vmatpush1.msra.mxu0 0.0
        %391 = vmatprep.subr.mxu0 0.0
        %392 = vmatpush1.msra.mxu0 0.0
        %393 = vmatprep.subr.mxu0 0.0
        %394 = vmatpush1.msra.mxu0 %v283
        %395 = vmatprep.subr.mxu0 0.0
        %396 = vmatpush2.msra.mxu0 0.0
        %397 = vmatprep.subr.mxu0 0.0
        %398 = vmatpush2.msra.mxu0 0.0
        %399 = vmatprep.subr.mxu0 0.0
        %400 = vmatpush2.msra.mxu0 0.0
        %401 = vmatprep.subr.mxu0 0.0
        %402 = vmatpush2.msra.mxu0 0.0
        %403 = vmatprep.subr.mxu0 0.0
        %404 = vmatpush2.msra.mxu0 0.0
        %405 = vmatprep.subr.mxu0 0.0
        %406 = vmatpush2.msra.mxu0 0.0
        %407 = vmatprep.subr.mxu0 0.0
        %408 = vmatpush2.msra.mxu0 0.0
        %409 = vmatprep.subr.mxu0 0.0
        %410 = vmatpush2.msra.mxu0 0.0
        %411 = vmatprep.subr.mxu0 0.0
        %412 = vmatpush2.msra.mxu0 0.0
        %413 = vmatprep.subr.mxu0 0.0
        %414 = vmatpush2.msra.mxu0 0.0
        %415 = vmatprep.subr.mxu0 0.0
        %416 = vmatpush2.msra.mxu0 0.0
        %417 = vmatprep.subr.mxu0 0.0
        %418 = vmatpush2.msra.mxu0 0.0
        %419 = vmatprep.subr.mxu0 0.0
        %420 = vmatpush2.msra.mxu0 0.0
        %421 = vmatprep.subr.mxu0 0.0
        %422 = vmatpush2.msra.mxu0 0.0
        %423 = vmatprep.subr.mxu0 0.0
        %424 = vmatpush2.msra.mxu0 0.0
        %425 = vmatprep.subr.mxu0 0.0
        %426 = vmatpush2.msra.mxu0 0.0
        %427 = vmatprep.mubr.f32.mxu0 0.0
        %428 = vmatmul.mubr.f32.gmra.mxu0 %v361
        %v429 = vpop.f32.mrf.mxu0
        %v430 = vadd.f32 %v357, %v429
        %v431 = vpop.f32.mrf.mxu0
        %432 = vdwg.mxu0
        %v433 = vld [vmem:[%s242 + $0x2] sm:$0x1f]
        %v434 = vld [vmem:[#allocation4 + $0x10] sm:$0xff]
        %v436 = vsel %vm286, %v433, 0
        %438 = vmatprep.subr.mxu0 0.0
        %439 = vmatpush1.msra.mxu0 0.0
        %440 = vmatprep.subr.mxu0 0.0
        %441 = vmatpush1.msra.mxu0 0.0
        %442 = vmatprep.subr.mxu0 0.0
        %443 = vmatpush1.msra.mxu0 0.0
        %444 = vmatprep.subr.mxu0 0.0
        %445 = vmatpush1.msra.mxu0 0.0
        %446 = vmatprep.subr.mxu0 0.0
        %447 = vmatpush1.msra.mxu0 0.0
        %448 = vmatprep.subr.mxu0 0.0
        %449 = vmatpush1.msra.mxu0 0.0
        %450 = vmatprep.subr.mxu0 0.0
        %451 = vmatpush1.msra.mxu0 0.0
        %452 = vmatprep.subr.mxu0 0.0
        %453 = vmatpush1.msra.mxu0 0.0
        %454 = vmatprep.subr.mxu0 0.0
        %455 = vmatpush1.msra.mxu0 0.0
        %456 = vmatprep.subr.mxu0 0.0
        %457 = vmatpush1.msra.mxu0 0.0
        %458 = vmatprep.subr.mxu0 0.0
        %459 = vmatpush1.msra.mxu0 0.0
        %460 = vmatprep.subr.mxu0 0.0
        %461 = vmatpush1.msra.mxu0 0.0
        %462 = vmatprep.subr.mxu0 0.0
        %463 = vmatpush1.msra.mxu0 0.0
        %464 = vmatprep.subr.mxu0 0.0
        %465 = vmatpush1.msra.mxu0 0.0
        %466 = vmatprep.subr.mxu0 0.0
        %467 = vmatpush1.msra.mxu0 0.0
        %468 = vmatprep.subr.mxu0 0.0
        %469 = vmatpush1.msra.mxu0 %v434
        %470 = vmatprep.subr.mxu0 0.0
        %471 = vmatpush2.msra.mxu0 0.0
        %472 = vmatprep.subr.mxu0 0.0
        %473 = vmatpush2.msra.mxu0 0.0
        %474 = vmatprep.subr.mxu0 0.0
        %475 = vmatpush2.msra.mxu0 0.0
        %476 = vmatprep.subr.mxu0 0.0
        %477 = vmatpush2.msra.mxu0 0.0
        %478 = vmatprep.subr.mxu0 0.0
        %479 = vmatpush2.msra.mxu0 0.0
        %480 = vmatprep.subr.mxu0 0.0
        %481 = vmatpush2.msra.mxu0 0.0
        %482 = vmatprep.subr.mxu0 0.0
        %483 = vmatpush2.msra.mxu0 0.0
        %484 = vmatprep.subr.mxu0 0.0
        %485 = vmatpush2.msra.mxu0 0.0
        %486 = vmatprep.subr.mxu0 0.0
        %487 = vmatpush2.msra.mxu0 0.0
        %488 = vmatprep.subr.mxu0 0.0
        %489 = vmatpush2.msra.mxu0 0.0
        %490 = vmatprep.subr.mxu0 0.0
        %491 = vmatpush2.msra.mxu0 0.0
        %492 = vmatprep.subr.mxu0 0.0
        %493 = vmatpush2.msra.mxu0 0.0
        %494 = vmatprep.subr.mxu0 0.0
        %495 = vmatpush2.msra.mxu0 0.0
        %496 = vmatprep.subr.mxu0 0.0
        %497 = vmatpush2.msra.mxu0 0.0
        %498 = vmatprep.subr.mxu0 0.0
        %499 = vmatpush2.msra.mxu0 0.0
        %500 = vmatprep.subr.mxu0 0.0
        %501 = vmatpush2.msra.mxu0 0.0
        %502 = vmatprep.mubr.f32.mxu0 0.0
        %503 = vmatmul.mubr.f32.gmra.mxu0 %v436
        %v504 = vpop.f32.mrf.mxu0
        %v505 = vadd.f32 0.0, %v504
        %v506 = vpop.f32.mrf.mxu0
        %507 = vdwg.mxu0
        %v508 = vadd.f32 %v430, %v505
        %v509 = vld [vmem:[%s242 + $0x3] sm:$0x1f]
        %v510 = vld [vmem:[#allocation4 + $0x18] sm:$0xff]
        %v512 = vsel %vm286, %v509, 0
        %514 = vmatprep.subr.mxu0 0.0
        %515 = vmatpush1.msra.mxu0 0.0
        %516 = vmatprep.subr.mxu0 0.0
        %517 = vmatpush1.msra.mxu0 0.0
        %518 = vmatprep.subr.mxu0 0.0
        %519 = vmatpush1.msra.mxu0 0.0
        %520 = vmatprep.subr.mxu0 0.0
        %521 = vmatpush1.msra.mxu0 0.0
        %522 = vmatprep.subr.mxu0 0.0
        %523 = vmatpush1.msra.mxu0 0.0
        %524 = vmatprep.subr.mxu0 0.0
        %525 = vmatpush1.msra.mxu0 0.0
        %526 = vmatprep.subr.mxu0 0.0
        %527 = vmatpush1.msra.mxu0 0.0
        %528 = vmatprep.subr.mxu0 0.0
        %529 = vmatpush1.msra.mxu0 0.0
        %530 = vmatprep.subr.mxu0 0.0
        %531 = vmatpush1.msra.mxu0 0.0
        %532 = vmatprep.subr.mxu0 0.0
        %533 = vmatpush1.msra.mxu0 0.0
        %534 = vmatprep.subr.mxu0 0.0
        %535 = vmatpush1.msra.mxu0 0.0
        %536 = vmatprep.subr.mxu0 0.0
        %537 = vmatpush1.msra.mxu0 0.0
        %538 = vmatprep.subr.mxu0 0.0
        %539 = vmatpush1.msra.mxu0 0.0
        %540 = vmatprep.subr.mxu0 0.0
        %541 = vmatpush1.msra.mxu0 0.0
        %542 = vmatprep.subr.mxu0 0.0
        %543 = vmatpush1.msra.mxu0 0.0
        %544 = vmatprep.subr.mxu0 0.0
        %545 = vmatpush1.msra.mxu0 %v510
        %546 = vmatprep.subr.mxu0 0.0
        %547 = vmatpush2.msra.mxu0 0.0
        %548 = vmatprep.subr.mxu0 0.0
        %549 = vmatpush2.msra.mxu0 0.0
        %550 = vmatprep.subr.mxu0 0.0
        %551 = vmatpush2.msra.mxu0 0.0
        %552 = vmatprep.subr.mxu0 0.0
        %553 = vmatpush2.msra.mxu0 0.0
        %554 = vmatprep.subr.mxu0 0.0
        %555 = vmatpush2.msra.mxu0 0.0
        %556 = vmatprep.subr.mxu0 0.0
        %557 = vmatpush2.msra.mxu0 0.0
        %558 = vmatprep.subr.mxu0 0.0
        %559 = vmatpush2.msra.mxu0 0.0
        %560 = vmatprep.subr.mxu0 0.0
        %561 = vmatpush2.msra.mxu0 0.0
        %562 = vmatprep.subr.mxu0 0.0
        %563 = vmatpush2.msra.mxu0 0.0
        %564 = vmatprep.subr.mxu0 0.0
        %565 = vmatpush2.msra.mxu0 0.0
        %566 = vmatprep.subr.mxu0 0.0
        %567 = vmatpush2.msra.mxu0 0.0
        %568 = vmatprep.subr.mxu0 0.0
        %569 = vmatpush2.msra.mxu0 0.0
        %570 = vmatprep.subr.mxu0 0.0
        %571 = vmatpush2.msra.mxu0 0.0
        %572 = vmatprep.subr.mxu0 0.0
        %573 = vmatpush2.msra.mxu0 0.0
        %574 = vmatprep.subr.mxu0 0.0
        %575 = vmatpush2.msra.mxu0 0.0
        %576 = vmatprep.subr.mxu0 0.0
        %577 = vmatpush2.msra.mxu0 0.0
        %578 = vmatprep.mubr.f32.mxu0 0.0
        %579 = vmatmul.mubr.f32.gmra.mxu0 %v512
        %v580 = vpop.f32.mrf.mxu0
        %v581 = vadd.f32 0.0, %v580
        %v582 = vpop.f32.mrf.mxu0
        %583 = vdwg.mxu0
        %v584 = vadd.f32 %v508, %v581
        %v585 = vld [vmem:[%s4] sm:$0x1]
        %v586 = vlaneseq
        %v587 = vshrl.u32 %v586, 7
        %v588 = vsub.s32 0, %v587
        %v589 = vrot.slane %v585, %v588
        %v590 = vadd.f32 %v584, %v589
        %v591 = vmax.f32 %v590, 0.0
        %vm592 = vcmask 258048
        %v593 = vsel %vm592, %v591, 0.0
        %v594 = vrot.slane %v593, 4
        %v595 = vadd.f32 %v593, %v594
        %v596 = vrot.slane %v595, 2
        %v597 = vadd.f32 %v595, %v596
        %v598 = vrot.slane %v597, 1
        %v599 = vadd.f32 %v597, %v598
        %v600 = vrcp.pop 5.0
        %v601 = vmul.f32 %v599, %v600
        %v602 = vld [vmem:[#allocation6] sm:$0xff]
        %v603 = vld [vmem:[#allocation6 + $0x8] sm:$0xff]
        %v604 = vld [vmem:[#allocation6 + $0x10] sm:$0xff]
        %v605 = vld [vmem:[#allocation6 + $0x18] sm:$0xff]
        %v606 = vld [vmem:[%s4 + $0x1] sm:$0x1]
        %vm607 = vcmask 261120
        %v609 = vsel %vm607, %v601, 0
        %611 = vmatprep.subr.mxu0 0.0
        %612 = vmatpush1.msra.mxu0 0.0
        %613 = vmatprep.subr.mxu0 0.0
        %614 = vmatpush1.msra.mxu0 0.0
        %615 = vmatprep.subr.mxu0 0.0
        %616 = vmatpush1.msra.mxu0 0.0
        %617 = vmatprep.subr.mxu0 0.0
        %618 = vmatpush1.msra.mxu0 0.0
        %619 = vmatprep.subr.mxu0 0.0
        %620 = vmatpush1.msra.mxu0 0.0
        %621 = vmatprep.subr.mxu0 0.0
        %622 = vmatpush1.msra.mxu0 0.0
        %623 = vmatprep.subr.mxu0 0.0
        %624 = vmatpush1.msra.mxu0 0.0
        %625 = vmatprep.subr.mxu0 0.0
        %626 = vmatpush1.msra.mxu0 0.0
        %627 = vmatprep.subr.mxu0 0.0
        %628 = vmatpush1.msra.mxu0 0.0
        %629 = vmatprep.subr.mxu0 0.0
        %630 = vmatpush1.msra.mxu0 0.0
        %631 = vmatprep.subr.mxu0 0.0
        %632 = vmatpush1.msra.mxu0 0.0
        %633 = vmatprep.subr.mxu0 0.0
        %634 = vmatpush1.msra.mxu0 0.0
        %635 = vmatprep.subr.mxu0 0.0
        %636 = vmatpush1.msra.mxu0 %v605
        %637 = vmatprep.subr.mxu0 0.0
        %638 = vmatpush1.msra.mxu0 %v604
        %639 = vmatprep.subr.mxu0 0.0
        %640 = vmatpush1.msra.mxu0 %v603
        %641 = vmatprep.subr.mxu0 0.0
        %642 = vmatpush1.msra.mxu0 %v602
        %643 = vmatprep.subr.mxu0 0.0
        %644 = vmatpush2.msra.mxu0 0.0
        %645 = vmatprep.subr.mxu0 0.0
        %646 = vmatpush2.msra.mxu0 0.0
        %647 = vmatprep.subr.mxu0 0.0
        %648 = vmatpush2.msra.mxu0 0.0
        %649 = vmatprep.subr.mxu0 0.0
        %650 = vmatpush2.msra.mxu0 0.0
        %651 = vmatprep.subr.mxu0 0.0
        %652 = vmatpush2.msra.mxu0 0.0
        %653 = vmatprep.subr.mxu0 0.0
        %654 = vmatpush2.msra.mxu0 0.0
        %655 = vmatprep.subr.mxu0 0.0
        %656 = vmatpush2.msra.mxu0 0.0
        %657 = vmatprep.subr.mxu0 0.0
        %658 = vmatpush2.msra.mxu0 0.0
        %659 = vmatprep.subr.mxu0 0.0
        %660 = vmatpush2.msra.mxu0 0.0
        %661 = vmatprep.subr.mxu0 0.0
        %662 = vmatpush2.msra.mxu0 0.0
        %663 = vmatprep.subr.mxu0 0.0
        %664 = vmatpush2.msra.mxu0 0.0
        %665 = vmatprep.subr.mxu0 0.0
        %666 = vmatpush2.msra.mxu0 0.0
        %667 = vmatprep.subr.mxu0 0.0
        %668 = vmatpush2.msra.mxu0 0.0
        %669 = vmatprep.subr.mxu0 0.0
        %670 = vmatpush2.msra.mxu0 0.0
        %671 = vmatprep.subr.mxu0 0.0
        %672 = vmatpush2.msra.mxu0 0.0
        %673 = vmatprep.subr.mxu0 0.0
        %674 = vmatpush2.msra.mxu0 0.0
        %675 = vmatprep.mubr.f32.mxu0 0.0
        %676 = vmatmul.mubr.f32.gmra.mxu0 %v609
        %v677 = vpop.f32.mrf.mxu0
        %v678 = vadd.f32 %v606, %v677
        %v679 = vpop.f32.mrf.mxu0
        %680 = vdwg.mxu0
        %v681 = vmax.f32 %v678, 0.0
        %v682 = vld [vmem:[#allocation7] sm:$0xff]
        %v683 = vld [vmem:[#allocation7 + $0x8] sm:$0xff]
        %v684 = vld [vmem:[#allocation7 + $0x10] sm:$0xff]
        %v685 = vld [vmem:[#allocation7 + $0x18] sm:$0xff]
        %v686 = vld [vmem:[%s4 + $0x2] sm:$0x1]
        %v688 = vsel %vm607, %v681, 0
        %690 = vmatprep.subr.mxu0 0.0
        %691 = vmatpush1.msra.mxu0 0.0
        %692 = vmatprep.subr.mxu0 0.0
        %693 = vmatpush1.msra.mxu0 0.0
        %694 = vmatprep.subr.mxu0 0.0
        %695 = vmatpush1.msra.mxu0 0.0
        %696 = vmatprep.subr.mxu0 0.0
        %697 = vmatpush1.msra.mxu0 0.0
        %698 = vmatprep.subr.mxu0 0.0
        %699 = vmatpush1.msra.mxu0 0.0
        %700 = vmatprep.subr.mxu0 0.0
        %701 = vmatpush1.msra.mxu0 0.0
        %702 = vmatprep.subr.mxu0 0.0
        %703 = vmatpush1.msra.mxu0 0.0
        %704 = vmatprep.subr.mxu0 0.0
        %705 = vmatpush1.msra.mxu0 0.0
        %706 = vmatprep.subr.mxu0 0.0
        %707 = vmatpush1.msra.mxu0 0.0
        %708 = vmatprep.subr.mxu0 0.0
        %709 = vmatpush1.msra.mxu0 0.0
        %710 = vmatprep.subr.mxu0 0.0
        %711 = vmatpush1.msra.mxu0 0.0
        %712 = vmatprep.subr.mxu0 0.0
        %713 = vmatpush1.msra.mxu0 0.0
        %714 = vmatprep.subr.mxu0 0.0
        %715 = vmatpush1.msra.mxu0 %v685
        %716 = vmatprep.subr.mxu0 0.0
        %717 = vmatpush1.msra.mxu0 %v684
        %718 = vmatprep.subr.mxu0 0.0
        %719 = vmatpush1.msra.mxu0 %v683
        %720 = vmatprep.subr.mxu0 0.0
        %721 = vmatpush1.msra.mxu0 %v682
        %722 = vmatprep.subr.mxu0 0.0
        %723 = vmatpush2.msra.mxu0 0.0
        %724 = vmatprep.subr.mxu0 0.0
        %725 = vmatpush2.msra.mxu0 0.0
        %726 = vmatprep.subr.mxu0 0.0
        %727 = vmatpush2.msra.mxu0 0.0
        %728 = vmatprep.subr.mxu0 0.0
        %729 = vmatpush2.msra.mxu0 0.0
        %730 = vmatprep.subr.mxu0 0.0
        %731 = vmatpush2.msra.mxu0 0.0
        %732 = vmatprep.subr.mxu0 0.0
        %733 = vmatpush2.msra.mxu0 0.0
        %734 = vmatprep.subr.mxu0 0.0
        %735 = vmatpush2.msra.mxu0 0.0
        %736 = vmatprep.subr.mxu0 0.0
        %737 = vmatpush2.msra.mxu0 0.0
        %738 = vmatprep.subr.mxu0 0.0
        %739 = vmatpush2.msra.mxu0 0.0
        %740 = vmatprep.subr.mxu0 0.0
        %741 = vmatpush2.msra.mxu0 0.0
        %742 = vmatprep.subr.mxu0 0.0
        %743 = vmatpush2.msra.mxu0 0.0
        %744 = vmatprep.subr.mxu0 0.0
        %745 = vmatpush2.msra.mxu0 0.0
        %746 = vmatprep.subr.mxu0 0.0
        %747 = vmatpush2.msra.mxu0 0.0
        %748 = vmatprep.subr.mxu0 0.0
        %749 = vmatpush2.msra.mxu0 0.0
        %750 = vmatprep.subr.mxu0 0.0
        %751 = vmatpush2.msra.mxu0 0.0
        %752 = vmatprep.subr.mxu0 0.0
        %753 = vmatpush2.msra.mxu0 0.0
        %754 = vmatprep.mubr.f32.mxu0 0.0
        %755 = vmatmul.mubr.f32.gmra.mxu0 %v688
        %v756 = vpop.f32.mrf.mxu0
        %v757 = vadd.f32 %v686, %v756
        %v758 = vpop.f32.mrf.mxu0
        %759 = vdwg.mxu0
        %760 = vst [vmem:[%s281] sm:$0x1] %v757
        %p761 = scmp.lt.s32.totalorder %s21, 3
        %s762 = scalar_select %p761, %s21, 3
        %s763 = scalar_lea.vmem %s5, %s762
        // Predicated region
        $region57: #{mlp_forward_batched.1} parent=39 // pred_check
          %p764 = pneg %p149
        $region58: #{mlp_forward_batched.1} parent=39 // pred_check_branch
          %766 = sbr.rel (%p764) target = $region60
        $region59: #{mlp_forward_batched.1} parent=39 // pred_region
          _
        $region60: #{mlp_forward_batched.1} parent=39 // pred_fallthru
          _
      $region40: #{mlp_forward_batched.1} parent=5 // pred_fallthru
        _
      %p767 = scmp.le.s32.totalorder 2, %s16
      // Predicated region
      $region61: #{mlp_forward_batched.1} parent=5 // pred_check
        %p768 = pneg %p767
      $region62: #{mlp_forward_batched.1} parent=5 // pred_check_branch
        %770 = sbr.rel (%p768) target = $region64
      $region63: #{mlp_forward_batched.1} parent=5 // pred_region
        %s771 = ssub.s32 %s16, 2
        // Predicated region
        $region65: #{mlp_forward_batched.1} parent=63 // pred_check
          %p772 = pneg %p155
        $region66: #{mlp_forward_batched.1} parent=63 // pred_check_branch
          %774 = sbr.rel (%p772) target = $region68
        $region67: #{mlp_forward_batched.1} parent=63 // pred_region
          %p775 = scmp.lt.s32.totalorder %s22, 3
          %s776 = scalar_select %p775, %s22, 3
          %s777 = scalar_lea.vmem %s5, %s776
        $region68: #{mlp_forward_batched.1} parent=63 // pred_fallthru
          _
      $region64: #{mlp_forward_batched.1} parent=5 // pred_fallthru
        _
    $region6: #{mlp_forward_batched.1} parent=1 // loop_footer
      %s20 = sadd.s32 1, %s16
    $region7: #{mlp_forward_batched.1} parent=1 // loop_footer_branch
      %15 = sbr.rel target = $region3
    $region8: #{mlp_forward_batched.1} parent=1 // loop_exit
      _
    %778 = vsyncpa [#allocation3], 1
    %s779 = scalar_lea.sflag [#allocation3], 1
    %780 = vsyncpa %s779, 1
    %781 = vsyncpa [#allocation5], 1
    %782 = vsyncpa [#allocation8], 1

</llo_original>
